<compile_context>
chip_gen: v7x
topology: tpu7x:2x2x1
jax: 0.10.0
libtpu: 0.0.40
codegen_flags: <defaults>
</compile_context>

<pallas_src>
import functools
import math

import jax
import jax.numpy as jnp
from jax import lax
from jax.experimental import pallas as pl
from jax.experimental.pallas import tpu as pltpu


def _flat_nce_sumexp_kernel(q_ref, k_ref, lse_ref, l_sc, *,
                            batch, n_valid, tm, tn, inv_temp, exp_dtype):
    """One (row-tile, col-tile) step of  sum_{j in negatives} exp(sim_ij/T - 1/T).

    q_ref : (tm, D) row tile of unit-norm features pre-scaled by 1/T (matmul dtype).
    k_ref : (tn, D) column tile of unit-norm features (matmul dtype), streamed.
    l_sc  : (tm, 1) f32 running sum.  1/T is a valid fixed softmax shift because the
            rows are unit-norm (sim <= 1), so no online max is needed.
    """
    ri = pl.program_id(0)
    ci = pl.program_id(1)
    n_col = pl.num_programs(1)

    @pl.when(ci == 0)
    def _init():
        l_sc[...] = jnp.zeros_like(l_sc)

    # sim/T tile on the MXU (1/T folded into Q in the wrapper); contract the last
    # dims of both operands -> no k.T materialization.
    s = lax.dot_general(q_ref[...], k_ref[...], (((1,), (1,)), ((), ())),
                        preferred_element_type=jnp.float32)
    # Fixed-max shift: arguments are <= ~0, exp never overflows.  exp_dtype=bfloat16
    # (v6e/v7x only) roughly doubles EUP throughput in the exp-bound small-D regime.
    e = jnp.exp((s - jnp.float32(inv_temp)).astype(exp_dtype))

    row0 = ri * tm
    col0 = ci * tn

    # Scalar gate: only tiles that can contain the diagonal, a positive column or
    # padded columns pay the iota/compare masking cost.
    def _overlap(a0, alen, b0, blen):
        return (a0 < b0 + blen) & (b0 < a0 + alen)

    has_diag = _overlap(row0, tm, col0, tn)
    has_pos = _overlap(row0 + batch, tm, col0, tn) | _overlap(row0 - batch, tm, col0, tn)
    has_pad = col0 + tn > n_valid
    needs_mask = has_diag | has_pos | has_pad

    @pl.when(needs_mask)
    def _masked():
        r = lax.broadcasted_iota(jnp.int32, (tm, tn), 0) + row0
        c = lax.broadcasted_iota(jnp.int32, (tm, tn), 1) + col0
        # Drop: diagonal, the positive column (r+B for r<B, r-B for r>=B), pad columns.
        drop = (c == r) | (c == r + batch) | (c + batch == r) | (c >= n_valid)
        kept = jnp.where(drop, jnp.zeros_like(e), e)
        l_sc[...] += jnp.sum(kept.astype(jnp.float32), axis=-1, keepdims=True)

    @pl.when(jnp.logical_not(needs_mask))
    def _plain():
        l_sc[...] += jnp.sum(e.astype(jnp.float32), axis=-1, keepdims=True)

    @pl.when(ci == n_col - 1)
    def _finalize():
        lse_ref[...] = jnp.float32(inv_temp) + jnp.log(l_sc[...])


def _round_up(x, m):
    return ((x + m - 1) // m) * m


def flat_nce(z_i, z_j, temperature, *, matmul_dtype=jnp.float32, exp_dtype=None,
             tm=None, tn=None, k_buffers=None):
    """FlatNCE forward.  Returns (loss, clogits); loss == exp(clogits - stop_grad(clogits))
    (identically 1.0 in the forward pass, as in the PyTorch module); clogits is (2B, 1).

    matmul_dtype : MXU operand dtype (bf16 recommended on v5e/v6e for HBM/MXU throughput).
    exp_dtype    : dtype of the per-tile exp (default f32; bf16 only pays off on v6e/v7x
                   when the single EUP slot is the bottleneck, i.e. small D).
    tm, tn       : row/column tile sizes (multiples of 8); defaults are generic caps,
                   tune per generation (256-multiples for the v6e/v7x MXU).
    k_buffers    : optional pipeline depth for the streamed K tiles (pl.Buffered).
    """
    assert z_i.ndim == 2 and z_i.shape == z_j.shape
    b, d = z_i.shape
    assert b >= 2, "FlatNCE needs at least 2 negatives per row (batch >= 2)"
    n = 2 * b
    inv_t = float(1.0 / temperature)
    if exp_dtype is None:
        exp_dtype = jnp.float32

    # --- hoisted one-pass O(N*D) preprocessing: normalize once, fold 1/T into Q ----
    z = jnp.concatenate([z_i, z_j], axis=0).astype(jnp.float32)                 # (N, D)
    feats = z * lax.rsqrt(jnp.maximum(jnp.sum(z * z, axis=1, keepdims=True), 1e-24))
    q_all = (feats * jnp.float32(inv_t)).astype(matmul_dtype)                   # Q operand
    k_all = feats.astype(matmul_dtype)                                          # streamed K

    # --- tiling: sublane-aligned tiles; pad N instead of shrinking to tiny tiles ----
    tm_default = tm is None
    if tm is None:
        tm = min(256, _round_up(n, 8))
    if tn is None:
        tn = min(512, _round_up(n, 8))
    assert tm % 8 == 0 and tn % 8 == 0, "tile sizes must be multiples of 8 (sublane rule)"
    n_pad = _round_up(n, math.lcm(tm, tn))
    if tm_default and n_pad // tm == 1 and tm >= 16:
        tm //= 2   # >= 2 row tiles so the 'parallel' axis can feed both v7x TensorCores
    grid = (n_pad // tm, n_pad // tn)

    if n_pad > n:
        pad = ((0, n_pad - n), (0, 0))
        q_all = jnp.pad(q_all, pad)      # zero pad rows; pad columns masked in-kernel
        k_all = jnp.pad(k_all, pad)

    kernel = functools.partial(
        _flat_nce_sumexp_kernel,
        batch=b, n_valid=n, tm=tm, tn=tn, inv_temp=inv_t, exp_dtype=exp_dtype)

    itemsize = jnp.dtype(matmul_dtype).itemsize
    n_kbuf = 2 if k_buffers is None else k_buffers
    vmem_need = (2 * tm * d + n_kbuf * tn * d) * itemsize + 6 * tm * 4
    vmem_limit = int(min(max(2 * vmem_need, 16 << 20), 48 << 20))

    k_spec_kwargs = {}
    if k_buffers is not None and grid[1] >= k_buffers:
        # Deeper K pipeline for small-D, HBM-bound cases on v5e/v6e (sweep 2 vs 3).
        k_spec_kwargs["pipeline_mode"] = pl.Buffered(k_buffers)

    lse_full = pl.pallas_call(
        kernel,
        out_shape=jax.ShapeDtypeStruct((n_pad, 1), jnp.float32),
        grid_spec=pltpu.PrefetchScalarGridSpec(
            num_scalar_prefetch=0,
            grid=grid,
            in_specs=[
                # Row tile of pre-scaled normalized features: constant block across ci.
                pl.BlockSpec((tm, d), lambda ri, ci: (ri, 0)),
                # Column tile of normalized features: streamed along the reduction axis.
                pl.BlockSpec((tn, d), lambda ri, ci: (ci, 0), **k_spec_kwargs),
            ],
            out_specs=pl.BlockSpec((tm, 1), lambda ri, ci: (ri, 0)),
            scratch_shapes=[pltpu.VMEM((tm, 1), jnp.float32)],   # running sum of exp
        ),
        compiler_params=pltpu.CompilerParams(
            dimension_semantics=("parallel", "arbitrary"),
            vmem_limit_bytes=vmem_limit,
        ),
        cost_estimate=pl.CostEstimate(
            flops=2 * n_pad * n_pad * d,
            transcendentals=n_pad * n_pad,
            bytes_accessed=(grid[0] * n_pad * d + n_pad * d) * itemsize + n_pad * 4,
        ),
    )(q_all, k_all)

    lse = lse_full[:n]                                                   # (N, 1)
    # Positive-pair similarity from the two halves: O(B*D), no N x N mask.
    row_dot = jnp.sum(feats[:b] * feats[b:], axis=1, keepdims=True)      # (B, 1)
    positives = jnp.concatenate([row_dot, row_dot], axis=0)              # (N, 1)
    clogits = lse - positives * jnp.float32(inv_t)
    loss = jnp.exp(clogits - lax.stop_gradient(clogits))                 # forward value: 1.0
    return loss, clogits


def _flat_nce_reference(z_i, z_j, temperature):
    """Pure-JAX reference mirroring the PyTorch FlatNCE forward."""
    features = jnp.concatenate([z_i, z_j], axis=0).astype(jnp.float32)
    features = features / jnp.maximum(jnp.linalg.norm(features, axis=1, keepdims=True), 1e-12)
    n = features.shape[0]
    b = n // 2
    sim = jnp.matmul(features, features.T, precision=lax.Precision.HIGHEST)
    idx = jnp.arange(n)
    pos_col = (idx + b) % n
    positives = sim[idx, pos_col][:, None]
    row = idx[:, None]
    col = idx[None, :]
    neg_mask = (col != row) & (col != pos_col[:, None])
    logits = (sim - positives) / temperature
    logits = jnp.where(neg_mask, logits, -jnp.inf)
    clogits = jax.nn.logsumexp(logits, axis=1, keepdims=True)
    loss = jnp.exp(clogits - lax.stop_gradient(clogits))
    return loss, clogits


if __name__ == "__main__":
    key = jax.random.PRNGKey(0)
    k1, k2, k3, k4, k5, k6 = jax.random.split(key, 6)
    temperature = 0.5

    # Case 1: small shapes implied by the module (batch=4, hidden=32) -> N = 8, single tile.
    B, D = 4, 32
    z_i = jax.random.normal(k1, (B, D), dtype=jnp.float32)
    z_j = jax.random.normal(k2, (B, D), dtype=jnp.float32)

    loss, clogits = flat_nce(z_i, z_j, temperature)                      # f32 MXU operands
    jax.block_until_ready(clogits)
    loss_ref, clogits_ref = _flat_nce_reference(z_i, z_j, temperature)
    assert jnp.allclose(clogits, clogits_ref, rtol=2e-3, atol=2e-3), (clogits, clogits_ref)
    assert jnp.allclose(loss, jnp.ones_like(loss)), loss                 # forward value is 1.0

    # Same case with bf16 MXU operands (v5e/v6e throughput path); looser tolerance by design.
    loss_bf, clogits_bf = flat_nce(z_i, z_j, temperature, matmul_dtype=jnp.bfloat16)
    jax.block_until_ready(clogits_bf)
    assert jnp.allclose(clogits_bf, clogits_ref, rtol=3e-2, atol=3e-2), (clogits_bf, clogits_ref)

    # Case 2: multi-tile grid (4 x 4) to exercise the cross-tile accumulation and the
    # masked / unmasked tile paths.
    B2, D2 = 32, 32
    z_i2 = jax.random.normal(k3, (B2, D2), dtype=jnp.float32)
    z_j2 = jax.random.normal(k4, (B2, D2), dtype=jnp.float32)
    loss2, clogits2 = flat_nce(z_i2, z_j2, temperature, tm=16, tn=16)
    jax.block_until_ready(clogits2)
    _, clogits2_ref = _flat_nce_reference(z_i2, z_j2, temperature)
    assert jnp.allclose(clogits2, clogits2_ref, rtol=2e-3, atol=2e-3), (clogits2, clogits2_ref)
    assert jnp.allclose(loss2, jnp.ones_like(loss2)), loss2

    # Case 3: N = 12 does not divide the tile -> exercises row/column padding, the pad-column
    # mask, and a 2-row-tile grid (megacore-friendly split of the parallel axis).
    B3, D3 = 6, 32
    z_i3 = jax.random.normal(k5, (B3, D3), dtype=jnp.float32)
    z_j3 = jax.random.normal(k6, (B3, D3), dtype=jnp.float32)
    loss3, clogits3 = flat_nce(z_i3, z_j3, temperature)
    jax.block_until_ready(clogits3)
    _, clogits3_ref = _flat_nce_reference(z_i3, z_j3, temperature)
    assert jnp.allclose(clogits3, clogits3_ref, rtol=2e-3, atol=2e-3), (clogits3, clogits3_ref)
    assert jnp.allclose(loss3, jnp.ones_like(loss3)), loss3

    print("KERNEL_OK")
</pallas_src>

<mosaic_0001>
module attributes {stable_mosaic.version = 11 : i64} {
  func.func @_flat_nce_sumexp_kernel(%arg0: i32, %arg1: i32, %arg2: memref<8x32xf32, #tpu.memory_space<vmem>>, %arg3: memref<8x32xf32, #tpu.memory_space<vmem>>, %arg4: memref<8x1xf32, #tpu.memory_space<vmem>>, %arg5: memref<8x1xf32, #tpu.memory_space<vmem>>) attributes {dimension_semantics = [#tpu.dimension_semantics<parallel>, #tpu.dimension_semantics<arbitrary>], iteration_bounds = array<i64: 1, 1>, scalar_prefetch = 0 : i64, scratch_operands = 1 : i64, tpu.core_type = #tpu.core_type<tc>, window_params = [{transform_indices = @transform_0, window_bounds = array<i64: 8, 32>}, {transform_indices = @transform_1, window_bounds = array<i64: 8, 32>}, {transform_indices = @transform_2, window_bounds = array<i64: 8, 1>}]} {
    %c0_i32 = arith.constant 0 : i32
    %0 = arith.cmpi eq, %arg1, %c0_i32 : i32
    %1 = arith.extui %0 : i1 to i32
    %c0_i32_0 = arith.constant 0 : i32
    %2 = arith.cmpi ne, %1, %c0_i32_0 : i32
    scf.if %2 {
      %cst_19 = arith.constant 0.000000e+00 : f32
      %41 = vector.broadcast %cst_19 : f32 to vector<8x1xf32>
      %c0_20 = arith.constant 0 : index
      %c0_21 = arith.constant 0 : index
      %42 = vector.load %arg5[%c0_20, %c0_21] : memref<8x1xf32, #tpu.memory_space<vmem>>, vector<8x1xf32>
      tpu.vector_store %arg5[%c0_20, %c0_21], %41 {strides = array<i32>} : memref<8x1xf32, #tpu.memory_space<vmem>>, vector<8x1xf32>,
    } else {
    }
    %c0 = arith.constant 0 : index
    %c0_1 = arith.constant 0 : index
    %3 = vector.load %arg2[%c0, %c0_1] : memref<8x32xf32, #tpu.memory_space<vmem>>, vector<8x32xf32>
    %c0_2 = arith.constant 0 : index
    %c0_3 = arith.constant 0 : index
    %4 = vector.load %arg3[%c0_2, %c0_3] : memref<8x32xf32, #tpu.memory_space<vmem>>, vector<8x32xf32>
    %cst = arith.constant dense<0.000000e+00> : vector<8x8xf32>
    %5 = tpu.matmul %3, %4, %cst {dimension_numbers = #tpu.dot_dimension_numbers<[1], [1], [0], [0], [0, 0, 1, 0], [], []>} : vector<8x32xf32>, vector<8x32xf32>, vector<8x8xf32> -> vector<8x8xf32>
    %cst_4 = arith.constant 2.000000e+00 : f32
    %6 = vector.broadcast %cst_4 : f32 to vector<8x8xf32>
    %7 = arith.subf %5, %6 : vector<8x8xf32>
    %8 = math.exp %7 : vector<8x8xf32>
    %c8_i32 = arith.constant 8 : i32
    %9 = arith.muli %arg0, %c8_i32 : i32
    %c8_i32_5 = arith.constant 8 : i32
    %10 = arith.muli %arg1, %c8_i32_5 : i32
    %c8_i32_6 = arith.constant 8 : i32
    %11 = arith.addi %10, %c8_i32_6 : i32
    %12 = arith.cmpi slt, %9, %11 : i32
    %c8_i32_7 = arith.constant 8 : i32
    %13 = arith.addi %9, %c8_i32_7 : i32
    %14 = arith.cmpi slt, %10, %13 : i32
    %15 = arith.andi %12, %14 : i1
    %c4_i32 = arith.constant 4 : i32
    %16 = arith.addi %9, %c4_i32 : i32
    %c8_i32_8 = arith.constant 8 : i32
    %17 = arith.addi %10, %c8_i32_8 : i32
    %18 = arith.cmpi slt, %16, %17 : i32
    %c8_i32_9 = arith.constant 8 : i32
    %19 = arith.addi %16, %c8_i32_9 : i32
    %20 = arith.cmpi slt, %10, %19 : i32
    %21 = arith.andi %18, %20 : i1
    %c4_i32_10 = arith.constant 4 : i32
    %22 = arith.subi %9, %c4_i32_10 : i32
    %c8_i32_11 = arith.constant 8 : i32
    %23 = arith.addi %10, %c8_i32_11 : i32
    %24 = arith.cmpi slt, %22, %23 : i32
    %c8_i32_12 = arith.constant 8 : i32
    %25 = arith.addi %22, %c8_i32_12 : i32
    %26 = arith.cmpi slt, %10, %25 : i32
    %27 = arith.andi %24, %26 : i1
    %28 = arith.ori %21, %27 : i1
    %c8_i32_13 = arith.constant 8 : i32
    %29 = arith.addi %10, %c8_i32_13 : i32
    %c8_i32_14 = arith.constant 8 : i32
    %30 = arith.cmpi sgt, %29, %c8_i32_14 : i32
    %31 = arith.ori %15, %28 : i1
    %32 = arith.ori %31, %30 : i1
    %33 = arith.extui %32 : i1 to i32
    %c0_i32_15 = arith.constant 0 : i32
    %34 = arith.cmpi ne, %33, %c0_i32_15 : i32
    scf.if %34 {
      %41 = tpu.iota {dimensions = array<i32: 0>} : vector<8x8xi32>
      %42 = vector.broadcast %9 : i32 to vector<8x8xi32>
      %43 = arith.addi %41, %42 : vector<8x8xi32>
      %44 = tpu.iota {dimensions = array<i32: 1>} : vector<8x8xi32>
      %45 = vector.broadcast %10 : i32 to vector<8x8xi32>
      %46 = arith.addi %44, %45 : vector<8x8xi32>
      %47 = arith.cmpi eq, %46, %43 : vector<8x8xi32>
      %c4_i32_19 = arith.constant 4 : i32
      %48 = vector.broadcast %c4_i32_19 : i32 to vector<8x8xi32>
      %49 = arith.addi %43, %48 : vector<8x8xi32>
      %50 = arith.cmpi eq, %46, %49 : vector<8x8xi32>
      %51 = arith.ori %47, %50 : vector<8x8xi1>
      %c4_i32_20 = arith.constant 4 : i32
      %52 = vector.broadcast %c4_i32_20 : i32 to vector<8x8xi32>
      %53 = arith.addi %46, %52 : vector<8x8xi32>
      %54 = arith.cmpi eq, %53, %43 : vector<8x8xi32>
      %55 = arith.ori %51, %54 : vector<8x8xi1>
      %c8_i32_21 = arith.constant 8 : i32
      %56 = vector.broadcast %c8_i32_21 : i32 to vector<8x8xi32>
      %57 = arith.cmpi sge, %46, %56 : vector<8x8xi32>
      %58 = arith.ori %55, %57 : vector<8x8xi1>
      %cst_22 = arith.constant 0.000000e+00 : f32
      %59 = vector.broadcast %cst_22 : f32 to vector<8x8xf32>
      %60 = arith.select %58, %59, %8 : vector<8x8xi1>, vector<8x8xf32>
      %c0_23 = arith.constant 0 : index
      %c0_24 = arith.constant 0 : index
      %61 = vector.load %arg5[%c0_23, %c0_24] : memref<8x1xf32, #tpu.memory_space<vmem>>, vector<8x1xf32>
      %cst_25 = arith.constant dense<0.000000e+00> : vector<8xf32>
      %62 = vector.multi_reduction <add>, %60, %cst_25 [1] : vector<8x8xf32> to vector<8xf32>
      %63 = vector.shape_cast %62 : vector<8xf32> to vector<8x1xf32>
      %64 = arith.addf %61, %63 : vector<8x1xf32>
      %c0_26 = arith.constant 0 : index
      %c0_27 = arith.constant 0 : index
      %65 = vector.load %arg5[%c0_26, %c0_27] : memref<8x1xf32, #tpu.memory_space<vmem>>, vector<8x1xf32>
      tpu.vector_store %arg5[%c0_26, %c0_27], %64 {strides = array<i32>} : memref<8x1xf32, #tpu.memory_space<vmem>>, vector<8x1xf32>,
    } else {
    }
    %true = arith.constant true
    %35 = arith.xori %32, %true : i1
    %36 = arith.extui %35 : i1 to i32
    %c0_i32_16 = arith.constant 0 : i32
    %37 = arith.cmpi ne, %36, %c0_i32_16 : i32
    scf.if %37 {
      %c0_19 = arith.constant 0 : index
      %c0_20 = arith.constant 0 : index
      %41 = vector.load %arg5[%c0_19, %c0_20] : memref<8x1xf32, #tpu.memory_space<vmem>>, vector<8x1xf32>
      %cst_21 = arith.constant dense<0.000000e+00> : vector<8xf32>
      %42 = vector.multi_reduction <add>, %8, %cst_21 [1] : vector<8x8xf32> to vector<8xf32>
      %43 = vector.shape_cast %42 : vector<8xf32> to vector<8x1xf32>
      %44 = arith.addf %41, %43 : vector<8x1xf32>
      %c0_22 = arith.constant 0 : index
      %c0_23 = arith.constant 0 : index
      %45 = vector.load %arg5[%c0_22, %c0_23] : memref<8x1xf32, #tpu.memory_space<vmem>>, vector<8x1xf32>
      tpu.vector_store %arg5[%c0_22, %c0_23], %44 {strides = array<i32>} : memref<8x1xf32, #tpu.memory_space<vmem>>, vector<8x1xf32>,
    } else {
    }
    %c0_i32_17 = arith.constant 0 : i32
    %38 = arith.cmpi eq, %arg1, %c0_i32_17 : i32
    %39 = arith.extui %38 : i1 to i32
    %c0_i32_18 = arith.constant 0 : i32
    %40 = arith.cmpi ne, %39, %c0_i32_18 : i32
    scf.if %40 {
      %c0_19 = arith.constant 0 : index
      %c0_20 = arith.constant 0 : index
      %41 = vector.load %arg5[%c0_19, %c0_20] : memref<8x1xf32, #tpu.memory_space<vmem>>, vector<8x1xf32>
      %42 = math.log %41 : vector<8x1xf32>
      %cst_21 = arith.constant 2.000000e+00 : f32
      %43 = vector.broadcast %cst_21 : f32 to vector<8x1xf32>
      %44 = arith.addf %43, %42 : vector<8x1xf32>
      %c0_22 = arith.constant 0 : index
      %c0_23 = arith.constant 0 : index
      %45 = vector.load %arg4[%c0_22, %c0_23] : memref<8x1xf32, #tpu.memory_space<vmem>>, vector<8x1xf32>
      tpu.vector_store %arg4[%c0_22, %c0_23], %44 {strides = array<i32>} : memref<8x1xf32, #tpu.memory_space<vmem>>, vector<8x1xf32>,
    } else {
    }
    return
  }
  func.func @transform_0(%arg0: i32, %arg1: i32) -> (i32, i32) {
    %c0_i32 = arith.constant 0 : i32
    %c0_i32_0 = arith.constant 0 : i32
    return %arg0, %c0_i32 : i32, i32
  }
  func.func @transform_1(%arg0: i32, %arg1: i32) -> (i32, i32) {
    %c0_i32 = arith.constant 0 : i32
    %c0_i32_0 = arith.constant 0 : i32
    return %arg1, %c0_i32 : i32, i32
  }
  func.func @transform_2(%arg0: i32, %arg1: i32) -> (i32, i32) {
    %c0_i32 = arith.constant 0 : i32
    %c0_i32_0 = arith.constant 0 : i32
    return %arg0, %c0_i32 : i32, i32
  }
}

</mosaic_0001>

<llo_original>
// kernel: tpu_custom_call.1
$region0: #{tpu_custom_call.1}
  #allocation0 [shape = 'u32[]', space=smem, size = 0x4, offset = 0x4, fixed_abs, tag = 'smem constant byte address 0x4 - core index']
  #allocation1 [shape = 'u32[144,128]{1,0:T(1,128)}', space=vmem, size = 0x12000, scoped, tag = 'internal scratch']
  #allocation2 [shape = 'f32[8,1]{1,0:T(8,128)}', space=vmem, size = 0x1000, scoped, tag = 'scratch operand']
  %s0 = inlined_call_operand.hbm [shape: f32[8,32], index: 0, kind: input, shape index: {}]
  %s1 = inlined_call_operand.hbm [shape: f32[8,32], index: 1, kind: input, shape index: {}]
  %s2 = inlined_call_operand.vmem [shape: f32[8,1], index: 2, kind: output, shape index: {}]
  %s3 = sld [smem:[#allocation0]]
  $region42: #{tpu_custom_call.1} parent=0
    _
  %s5 = ssub.s32 1, %s3
  %s6 = scalar_select 0, %s5, %s3
  $region1: #{tpu_custom_call.1} parent=0
    #allocation3 [shape = 'u8[4096]{0}', space=vmem, size = 0x1000, scoped, tag = 'input window, operand 0, single buffered']
    #allocation4 [shape = 's32[1]{0}', space=sflag, size = 0x4, scoped, tag = 'scoped memory for tpu_custom_call.1']
    #allocation5 [shape = 'u8[4096]{0}', space=vmem, size = 0x1000, scoped, tag = 'input window, operand 1, single buffered']
    #allocation6 [shape = 's32[1]{0}', space=sflag, size = 0x4, scoped, tag = 'scoped memory for tpu_custom_call.1']
    %7 = vsyncpa [#allocation4], 0
    %8 = vsyncpa [#allocation6], 0
    // Predicated region
    $region2: #{tpu_custom_call.1} parent=1 // pred_check
      _
    $region3: #{tpu_custom_call.1} parent=1 // pred_check_branch
      %10 = sbr.rel (0) target = $region5
    $region4: #{tpu_custom_call.1} parent=1 // pred_region
      %s12 = ssub.s32 128, 128
      %13 = vsyncadd [#allocation4], %s12
      %s15 = sshll.u32 [#allocation3], 4
      %s16 = int_to_ptr.vmem [resolvable:$true] %s15
      %18 = dma.hbm_to_vmem [thread:$0]  %s0, 128, %s16, [#allocation4]
    $region5: #{tpu_custom_call.1} parent=1 // pred_fallthru
      _
    // Predicated region
    $region6: #{tpu_custom_call.1} parent=1 // pred_check
      _
    $region7: #{tpu_custom_call.1} parent=1 // pred_check_branch
      %20 = sbr.rel (0) target = $region9
    $region8: #{tpu_custom_call.1} parent=1 // pred_region
      %s22 = ssub.s32 128, 128
      %23 = vsyncadd [#allocation6], %s22
      %s25 = sshll.u32 [#allocation5], 4
      %s26 = int_to_ptr.vmem [resolvable:$true] %s25
      %28 = dma.hbm_to_vmem [thread:$0]  %s1, 128, %s26, [#allocation6]
    $region9: #{tpu_custom_call.1} parent=1 // pred_fallthru
      _
    // Predicated region
    $region10: #{tpu_custom_call.1} parent=1 // pred_check
      _
    $region11: #{tpu_custom_call.1} parent=1 // pred_check_branch
      %30 = sbr.rel (0) target = $region13
    $region12: #{tpu_custom_call.1} parent=1 // pred_region
      %31 = dma.done [#allocation4], 128
    $region13: #{tpu_custom_call.1} parent=1 // pred_fallthru
      _
    // Predicated region
    $region14: #{tpu_custom_call.1} parent=1 // pred_check
      _
    $region15: #{tpu_custom_call.1} parent=1 // pred_check_branch
      %33 = sbr.rel (0) target = $region17
    $region16: #{tpu_custom_call.1} parent=1 // pred_region
      %34 = dma.done [#allocation6], 128
    $region17: #{tpu_custom_call.1} parent=1 // pred_fallthru
      _
    %p35 = scmp.eq.s32.totalorder 0, 0
    // Predicated region
    $region18: #{tpu_custom_call.1} parent=1 // pred_check
      %p36 = pneg %p35
    $region19: #{tpu_custom_call.1} parent=1 // pred_check_branch
      %38 = sbr.rel (%p36) target = $region21
    $region20: #{tpu_custom_call.1} parent=1 // pred_region
      %vm39 = vcmask 7168
      %40 = vst.msk [vmem:[#allocation2] sm:$0xff] %vm39, 0.0
    $region21: #{tpu_custom_call.1} parent=1 // pred_fallthru
      _
    %v41 = vld [vmem:[#allocation3] sm:$0xff]
    %v42 = vld [vmem:[#allocation5] sm:$0xff]
    %vm43 = vcmask 261120
    %v45 = vsel %vm43, %v41, 0
    %v48 = vsel %vm43, %v42, 0
    %50 = vmatprep.subr.mxu0 0.0
    %51 = vmatpush1.xpose.msra.mxu0 %v48
    %52 = vmatprep.subr.mxu0 0.0
    %53 = vmatpush1.xpose.msra.mxu0 0.0
    %54 = vmatprep.subr.mxu0 0.0
    %55 = vmatpush1.xpose.msra.mxu0 0.0
    %56 = vmatprep.subr.mxu0 0.0
    %57 = vmatpush1.xpose.msra.mxu0 0.0
    %58 = vmatprep.subr.mxu0 0.0
    %59 = vmatpush1.xpose.msra.mxu0 0.0
    %60 = vmatprep.subr.mxu0 0.0
    %61 = vmatpush1.xpose.msra.mxu0 0.0
    %62 = vmatprep.subr.mxu0 0.0
    %63 = vmatpush1.xpose.msra.mxu0 0.0
    %64 = vmatprep.subr.mxu0 0.0
    %65 = vmatpush1.xpose.msra.mxu0 0.0
    %66 = vmatprep.subr.mxu0 0.0
    %67 = vmatpush1.xpose.msra.mxu0 0.0
    %68 = vmatprep.subr.mxu0 0.0
    %69 = vmatpush1.xpose.msra.mxu0 0.0
    %70 = vmatprep.subr.mxu0 0.0
    %71 = vmatpush1.xpose.msra.mxu0 0.0
    %72 = vmatprep.subr.mxu0 0.0
    %73 = vmatpush1.xpose.msra.mxu0 0.0
    %74 = vmatprep.subr.mxu0 0.0
    %75 = vmatpush1.xpose.msra.mxu0 0.0
    %76 = vmatprep.subr.mxu0 0.0
    %77 = vmatpush1.xpose.msra.mxu0 0.0
    %78 = vmatprep.subr.mxu0 0.0
    %79 = vmatpush1.xpose.msra.mxu0 0.0
    %80 = vmatprep.subr.mxu0 0.0
    %81 = vmatpush1.xpose.msra.mxu0 0.0
    %82 = vmatprep.subr.mxu0 0.0
    %83 = vmatpush1.xpose.msra.mxu0 0.0
    %84 = vmatprep.subr.mxu0 0.0
    %85 = vmatpush1.xpose.msra.mxu0 0.0
    %86 = vmatprep.subr.mxu0 0.0
    %87 = vmatpush1.xpose.msra.mxu0 0.0
    %88 = vmatprep.subr.mxu0 0.0
    %89 = vmatpush1.xpose.msra.mxu0 0.0
    %90 = vmatprep.subr.mxu0 0.0
    %91 = vmatpush1.xpose.msra.mxu0 0.0
    %92 = vmatprep.subr.mxu0 0.0
    %93 = vmatpush1.xpose.msra.mxu0 0.0
    %94 = vmatprep.subr.mxu0 0.0
    %95 = vmatpush1.xpose.msra.mxu0 0.0
    %96 = vmatprep.subr.mxu0 0.0
    %97 = vmatpush1.xpose.msra.mxu0 0.0
    %98 = vmatprep.subr.mxu0 0.0
    %99 = vmatpush1.xpose.msra.mxu0 0.0
    %100 = vmatprep.subr.mxu0 0.0
    %101 = vmatpush1.xpose.msra.mxu0 0.0
    %102 = vmatprep.subr.mxu0 0.0
    %103 = vmatpush1.xpose.msra.mxu0 0.0
    %104 = vmatprep.subr.mxu0 0.0
    %105 = vmatpush1.xpose.msra.mxu0 0.0
    %106 = vmatprep.subr.mxu0 0.0
    %107 = vmatpush1.xpose.msra.mxu0 0.0
    %108 = vmatprep.subr.mxu0 0.0
    %109 = vmatpush1.xpose.msra.mxu0 0.0
    %110 = vmatprep.subr.mxu0 0.0
    %111 = vmatpush1.xpose.msra.mxu0 0.0
    %112 = vmatprep.subr.mxu0 0.0
    %113 = vmatpush1.xpose.msra.mxu0 0.0
    %114 = vmatprep.mubr.f32.mxu0 0.0
    %115 = vmatmul.mubr.f32.gmra.mrb[0].mxu0 %v45
    %v116 = vpop.f32.mrb[0].mxu0
    %v117 = vadd.f32 0.0, %v116
    %v118 = vpop.f32.mrb[0].mxu0
    %119 = vdwg.mxu0
    %v120 = vsub.f32 %v117, 2.0
    %v121 = vmul.f32 %v120, 1.442695
    %v122 = vpow.pop %v121
    %s123 = smul.u32 0, 8
    %s124 = smul.u32 0, 8
    %s125 = sadd.s32 %s124, 8
    %p126 = scmp.lt.s32.totalorder %s123, %s125
    %s127 = sadd.s32 %s123, 8
    %p128 = scmp.lt.s32.totalorder %s124, %s127
    %p129 = pnand %p126, %p128
    %p130 = pneg %p129
    %s131 = sadd.s32 %s123, 4
    %p132 = scmp.lt.s32.totalorder %s131, %s125
    %s133 = sadd.s32 %s123, 12
    %p134 = scmp.lt.s32.totalorder %s124, %s133
    %p135 = pnand %p132, %p134
    %p136 = pneg %p135
    %s137 = ssub.s32 %s123, 4
    %p138 = scmp.lt.s32.totalorder %s137, %s125
    %p139 = scmp.lt.s32.totalorder %s124, %s131
    %p140 = pnand %p138, %p139
    %p141 = pneg %p140
    %p142 = por %p136, %p141
    %p143 = scmp.gt.s32.totalorder %s125, 8
    %p144 = por %p130, %p142
    %p145 = por %p144, %p143
    // Predicated region
    $region22: #{tpu_custom_call.1} parent=1 // pred_check
      %p146 = pneg %p145
    $region23: #{tpu_custom_call.1} parent=1 // pred_check_branch
      %148 = sbr.rel (%p146) target = $region25
    $region24: #{tpu_custom_call.1} parent=1 // pred_region
      %v149 = vlaneseq
      %v150 = vshrl.u32 %v149, 7
      %v151 = vstv %s123
      %v152 = vadd.s32 %v150, %v151
      %v153 = vlaneseq
      %v154 = vand.u32 %v153, 127
      %v155 = vstv %s124
      %v156 = vadd.s32 %v154, %v155
      %vm157 = vcmp.eq.s32.totalorder %v156, %v152
      %v158 = vadd.s32 %v152, 4
      %vm159 = vcmp.eq.s32.totalorder %v156, %v158
      %vm160 = vmor %vm157, %vm159
      %v161 = vadd.s32 %v156, 4
      %vm162 = vcmp.eq.s32.totalorder %v161, %v152
      %vm163 = vmor %vm160, %vm162
      %vm164 = vcmp.ge.s32.totalorder %v156, 8
      %vm165 = vmor %vm163, %vm164
      %v166 = vsel %vm165, 0.0, %v122
      %v167 = vld [vmem:[#allocation2] sm:$0xff]
      %vm168 = vcmask 64512
      %v169 = vsel %vm168, %v166, 0.0
      %170 = vadd.xlane.f32.xlu0 %v169
      %v171 = vpop.xlane.xlu0 %170
      %v172 = vadd.f32 %v167, %v171
      %vm173 = vcmask 7168
      %174 = vst.msk [vmem:[#allocation2] sm:$0xff] %vm173, %v172
    $region25: #{tpu_custom_call.1} parent=1 // pred_fallthru
      _
    %p175 = pneg %p145
    // Predicated region
    $region26: #{tpu_custom_call.1} parent=1 // pred_check
      _
    $region27: #{tpu_custom_call.1} parent=1 // pred_check_branch
      %177 = sbr.rel (%p145) target = $region29
    $region28: #{tpu_custom_call.1} parent=1 // pred_region
      %v178 = vld [vmem:[#allocation2] sm:$0xff]
      %vm179 = vcmask 64512
      %v180 = vsel %vm179, %v122, 0.0
      %181 = vadd.xlane.f32.xlu0 %v180
      %v182 = vpop.xlane.xlu0 %181
      %v183 = vadd.f32 %v178, %v182
      %vm184 = vcmask 7168
      %185 = vst.msk [vmem:[#allocation2] sm:$0xff] %vm184, %v183
    $region29: #{tpu_custom_call.1} parent=1 // pred_fallthru
      _
    // Predicated region
    $region30: #{tpu_custom_call.1} parent=1 // pred_check
      %p186 = pneg %p35
    $region31: #{tpu_custom_call.1} parent=1 // pred_check_branch
      %188 = sbr.rel (%p186) target = $region33
    $region32: #{tpu_custom_call.1} parent=1 // pred_region
      %v189 = vld [vmem:[#allocation2] sm:$0xff]
      %v190 = vlog2.pop %v189
      %v191 = vmul.f32 %v190, 0.6931472
      %v192 = vadd.f32 %v191, 2.0
      %vm193 = vcmask 7168
      %194 = vst.msk [vmem:[%s2] sm:$0xff] %vm193, %v192
    $region33: #{tpu_custom_call.1} parent=1 // pred_fallthru
      _
    // Predicated region
    $region34: #{tpu_custom_call.1} parent=1 // pred_check
      _
    $region35: #{tpu_custom_call.1} parent=1 // pred_check_branch
      %196 = sbr.rel (0) target = $region37
    $region36: #{tpu_custom_call.1} parent=1 // pred_region
      _
    $region37: #{tpu_custom_call.1} parent=1 // pred_fallthru
      _
    // Predicated region
    $region38: #{tpu_custom_call.1} parent=1 // pred_check
      _
    $region39: #{tpu_custom_call.1} parent=1 // pred_check_branch
      %198 = sbr.rel (0) target = $region41
    $region40: #{tpu_custom_call.1} parent=1 // pred_region
      _
    $region41: #{tpu_custom_call.1} parent=1 // pred_fallthru
      _
    %199 = vsyncpa [#allocation4], 1
    %200 = vsyncpa [#allocation6], 1

</llo_original>
